<compile_context>
chip_gen: v5e
topology: v5e:2x2
jax: 0.10.0
libtpu: 0.0.40
codegen_flags: <defaults>
</compile_context>

<pallas_src>
from math import sqrt

import jax
import jax.numpy as jnp
from jax.experimental import pallas as pl
from jax.experimental.pallas import tpu as pltpu

# ---- model config (small, consistent with the module's __init__ shapes) ----
B = 2          # batch
S = 8          # sequence length
D = 32         # in_dim (LayerNorm dim)
NUM_HEADS = 4
HEAD_DIM = D // NUM_HEADS
HID = 64       # mlp hidden
EPS = 1e-5     # torch.nn.LayerNorm default eps
SCALE = 1.0 / sqrt(HEAD_DIM)

# packed bias / LayerNorm-param block: one vector per sublane row, lane-aligned
VEC_W = 128
(ROW_BQKV, ROW_BO, ROW_B1, ROW_B2,
 ROW_G1, ROW_BE1, ROW_G2, ROW_BE2) = range(8)
VEC_ROWS = 8


def _layernorm(x, gamma, beta):
    # torch.nn.LayerNorm: biased variance, eps inside the rsqrt.
    mu = jnp.mean(x, axis=-1, keepdims=True)
    var = jnp.mean((x - mu) ** 2, axis=-1, keepdims=True)
    return (x - mu) * jax.lax.rsqrt(var + EPS) * gamma + beta


def post_norm_block_kernel(x_ref, wqkv_ref, wo_ref, w1_ref, w2_ref, vec_ref,
                           o_ref):
    x = x_ref[...]                                    # (B*S, D) f32
    vec = vec_ref[...]                                # (VEC_ROWS, VEC_W)

    # sublane-row reads: all lane-aligned at lane 0, no XLU lane rotates
    bqkv = vec[ROW_BQKV:ROW_BQKV + 1, :3 * D]         # (1, 3D)
    bo = vec[ROW_BO:ROW_BO + 1, :D]
    b1 = vec[ROW_B1:ROW_B1 + 1, :HID]
    b2 = vec[ROW_B2:ROW_B2 + 1, :D]
    g1 = vec[ROW_G1:ROW_G1 + 1, :D]
    be1 = vec[ROW_BE1:ROW_BE1 + 1, :D]
    g2 = vec[ROW_G2:ROW_G2 + 1, :D]
    be2 = vec[ROW_BE2:ROW_BE2 + 1, :D]

    # --- fused QKV projection on stacked batch rows ---
    qkv = jnp.dot(x, wqkv_ref[...],
                  preferred_element_type=jnp.float32) + bqkv      # (B*S, 3D)

    # --- per-head QK^T scores (batched over B), stacked on the sublane axis ---
    scores = []
    v_heads = []
    for h in range(NUM_HEADS):
        lo = h * HEAD_DIM
        qh = qkv[:, lo:lo + HEAD_DIM].reshape(B, S, HEAD_DIM)
        kh = qkv[:, D + lo:D + lo + HEAD_DIM].reshape(B, S, HEAD_DIM)
        vh = qkv[:, 2 * D + lo:2 * D + lo + HEAD_DIM].reshape(B, S, HEAD_DIM)
        scores.append(jnp.einsum("bqd,bkd->bqk", qh, kh,
                                 preferred_element_type=jnp.float32))
        v_heads.append(vh)

    # --- one softmax for all heads: (B, H*S, S) ---
    s_all = jnp.concatenate(scores, axis=1) * SCALE               # (B, H*S, S)
    s_all = s_all - jnp.max(s_all, axis=-1, keepdims=True)
    p_all = jnp.exp(s_all)
    p_all = p_all * pl.reciprocal(jnp.sum(p_all, axis=-1, keepdims=True),
                                  approx=True)

    # --- per-head PV + Wo row-slice accumulation (no lane concat) ---
    attn = None
    for h in range(NUM_HEADS):
        p_h = p_all[:, h * S:(h + 1) * S, :]                      # sublane slice
        ctx = jnp.einsum("bqk,bkd->bqd", p_h, v_heads[h],
                         preferred_element_type=jnp.float32)      # (B, S, Hd)
        part = jnp.dot(ctx.reshape(B * S, HEAD_DIM),
                       wo_ref[h * HEAD_DIM:(h + 1) * HEAD_DIM, :],
                       preferred_element_type=jnp.float32)        # (B*S, D)
        attn = part if attn is None else attn + part

    # --- res1: LayerNorm(x + dropout(mha(x)))  (dropout = identity) ---
    y = _layernorm(x + attn + bo, g1, be1)                        # (B*S, D)

    # --- mlp: Linear -> ReLU -> Linear ---
    h1 = jnp.dot(y, w1_ref[...], preferred_element_type=jnp.float32) + b1
    h1 = jnp.maximum(h1, 0.0)
    m = jnp.dot(h1, w2_ref[...], preferred_element_type=jnp.float32) + b2

    # --- res2: LayerNorm(y + dropout(mlp(y))) ---
    o_ref[...] = _layernorm(y + m, g2, be2).astype(o_ref.dtype)


def pack_params(params):
    """One-time layout packing (done OUTSIDE the per-call path)."""
    (wq, bq, wk, bk, wv, bv, wo, bo,
     g1, be1, w1, b1, w2, b2, g2, be2) = params
    wqkv = jnp.concatenate([wq, wk, wv], axis=1)                  # (D, 3D)

    def row(v):  # lane-pad a (1, W) vector to a full (1, VEC_W) sublane row
        return jnp.pad(v, ((0, 0), (0, VEC_W - v.shape[1])))

    vec = jnp.concatenate([
        row(jnp.concatenate([bq, bk, bv], axis=1)),               # ROW_BQKV
        row(bo), row(b1), row(b2),
        row(g1), row(be1), row(g2), row(be2)], axis=0)            # (8, 128)
    return wqkv, wo, w1, w2, vec


@jax.jit
def post_norm_logic(tgt, wqkv, wo, w1, w2, vec):
    Bn, Sn, Dn = tgt.shape
    x2d = tgt.reshape(Bn * Sn, Dn)                                # (B*S, D)
    vmem = pl.BlockSpec(memory_space=pltpu.MemorySpace.VMEM)
    out = pl.pallas_call(
        post_norm_block_kernel,
        out_shape=jax.ShapeDtypeStruct((Bn * Sn, Dn), jnp.float32),
        in_specs=[vmem] * 6,
        out_specs=vmem,
    )(x2d, wqkv, wo, w1, w2, vec)
    return out.reshape(Bn, Sn, Dn)


def init_params(key):
    ks = jax.random.split(key, 8)
    scale = 0.02
    # Linear weights stored as (in, out):  y = x @ W + b
    wq = jax.random.normal(ks[0], (D, D), jnp.float32) * scale
    wk = jax.random.normal(ks[1], (D, D), jnp.float32) * scale
    wv = jax.random.normal(ks[2], (D, D), jnp.float32) * scale
    wo = jax.random.normal(ks[3], (D, D), jnp.float32) * scale
    w1 = jax.random.normal(ks[4], (D, HID), jnp.float32) * scale
    w2 = jax.random.normal(ks[5], (HID, D), jnp.float32) * scale
    bq = jnp.zeros((1, D), jnp.float32)
    bk = jnp.zeros((1, D), jnp.float32)
    bv = jnp.zeros((1, D), jnp.float32)
    bo = jnp.zeros((1, D), jnp.float32)
    b1 = jnp.zeros((1, HID), jnp.float32)
    b2 = jnp.zeros((1, D), jnp.float32)
    # LayerNorm affine params (torch defaults: ones / zeros)
    g1 = jnp.ones((1, D), jnp.float32)
    be1 = jnp.zeros((1, D), jnp.float32)
    g2 = jnp.ones((1, D), jnp.float32)
    be2 = jnp.zeros((1, D), jnp.float32)
    return (wq, bq, wk, bk, wv, bv, wo, bo, g1, be1, w1, b1, w2, b2, g2, be2)


def reference(tgt, params):
    # pure-JAX reference with identical semantics (for correctness check)
    (wq, bq, wk, bk, wv, bv, wo, bo, g1, be1, w1, b1, w2, b2, g2, be2) = params

    def ln(x, g, b):
        mu = jnp.mean(x, -1, keepdims=True)
        var = jnp.mean((x - mu) ** 2, -1, keepdims=True)
        return (x - mu) / jnp.sqrt(var + EPS) * g + b

    q = tgt @ wq + bq
    k = tgt @ wk + bk
    v = tgt @ wv + bv
    qh = q.reshape(B, S, NUM_HEADS, HEAD_DIM).transpose(0, 2, 1, 3)
    kh = k.reshape(B, S, NUM_HEADS, HEAD_DIM).transpose(0, 2, 1, 3)
    vh = v.reshape(B, S, NUM_HEADS, HEAD_DIM).transpose(0, 2, 1, 3)
    s = jnp.einsum("bhqd,bhkd->bhqk", qh, kh) * SCALE
    p = jax.nn.softmax(s, axis=-1)
    o = jnp.einsum("bhqk,bhkd->bhqd", p, vh).transpose(0, 2, 1, 3).reshape(B, S, D)
    attn = o @ wo + bo
    y = ln(tgt + attn, g1, be1)
    m = jnp.maximum(y @ w1 + b1, 0.0) @ w2 + b2
    return ln(y + m, g2, be2)


if __name__ == "__main__":
    key = jax.random.PRNGKey(0)
    k_x, k_p = jax.random.split(key)
    tgt = jax.random.normal(k_x, (B, S, D), jnp.float32)
    params = init_params(k_p)

    # one-time weight/bias packing, outside the per-call jit path
    wqkv, wo, w1, w2, vec = pack_params(params)

    out = post_norm_logic(tgt, wqkv, wo, w1, w2, vec)
    jax.block_until_ready(out)

    ref = reference(tgt, params)
    assert out.shape == (B, S, D)
    assert jnp.allclose(out, ref, atol=1e-4, rtol=1e-4), \
        f"max abs diff {jnp.max(jnp.abs(out - ref))}"
    print("KERNEL_OK")
</pallas_src>

<mosaic_0001>
module attributes {stable_mosaic.version = 11 : i64} {
  func.func @post_norm_block_kernel(%arg0: memref<16x32xf32, #tpu.memory_space<vmem>>, %arg1: memref<32x96xf32, #tpu.memory_space<vmem>>, %arg2: memref<32x32xf32, #tpu.memory_space<vmem>>, %arg3: memref<32x64xf32, #tpu.memory_space<vmem>>, %arg4: memref<64x32xf32, #tpu.memory_space<vmem>>, %arg5: memref<8x128xf32, #tpu.memory_space<vmem>>, %arg6: memref<16x32xf32, #tpu.memory_space<vmem>>) attributes {dimension_semantics = [], scalar_prefetch = 0 : i64, scratch_operands = 0 : i64, tpu.core_type = #tpu.core_type<tc>} {
    %c0 = arith.constant 0 : index
    %c0_0 = arith.constant 0 : index
    %0 = vector.load %arg0[%c0, %c0_0] : memref<16x32xf32, #tpu.memory_space<vmem>>, vector<16x32xf32>
    %c0_1 = arith.constant 0 : index
    %c0_2 = arith.constant 0 : index
    %1 = vector.load %arg5[%c0_1, %c0_2] : memref<8x128xf32, #tpu.memory_space<vmem>>, vector<8x128xf32>
    %2 = vector.extract_strided_slice %1 {offsets = [0, 0], sizes = [1, 96], strides = [1, 1]} : vector<8x128xf32> to vector<1x96xf32>
    %3 = vector.extract_strided_slice %1 {offsets = [1, 0], sizes = [1, 32], strides = [1, 1]} : vector<8x128xf32> to vector<1x32xf32>
    %4 = vector.extract_strided_slice %1 {offsets = [2, 0], sizes = [1, 64], strides = [1, 1]} : vector<8x128xf32> to vector<1x64xf32>
    %5 = vector.extract_strided_slice %1 {offsets = [3, 0], sizes = [1, 32], strides = [1, 1]} : vector<8x128xf32> to vector<1x32xf32>
    %6 = vector.extract_strided_slice %1 {offsets = [4, 0], sizes = [1, 32], strides = [1, 1]} : vector<8x128xf32> to vector<1x32xf32>
    %7 = vector.extract_strided_slice %1 {offsets = [5, 0], sizes = [1, 32], strides = [1, 1]} : vector<8x128xf32> to vector<1x32xf32>
    %8 = vector.extract_strided_slice %1 {offsets = [6, 0], sizes = [1, 32], strides = [1, 1]} : vector<8x128xf32> to vector<1x32xf32>
    %9 = vector.extract_strided_slice %1 {offsets = [7, 0], sizes = [1, 32], strides = [1, 1]} : vector<8x128xf32> to vector<1x32xf32>
    %c0_3 = arith.constant 0 : index
    %c0_4 = arith.constant 0 : index
    %10 = vector.load %arg1[%c0_3, %c0_4] : memref<32x96xf32, #tpu.memory_space<vmem>>, vector<32x96xf32>
    %cst = arith.constant dense<0.000000e+00> : vector<16x96xf32>
    %11 = tpu.matmul %0, %10, %cst {dimension_numbers = #tpu.dot_dimension_numbers<[1], [0], [0], [1], [0, 0, 1, 1], [], []>} : vector<16x32xf32>, vector<32x96xf32>, vector<16x96xf32> -> vector<16x96xf32>
    %12 = vector.broadcast %2 : vector<1x96xf32> to vector<16x96xf32>
    %13 = arith.addf %11, %12 : vector<16x96xf32>
    %14 = vector.extract_strided_slice %13 {offsets = [0, 0], sizes = [16, 8], strides = [1, 1]} : vector<16x96xf32> to vector<16x8xf32>
    %15 = vector.shape_cast %14 : vector<16x8xf32> to vector<2x8x8xf32>
    %16 = vector.extract_strided_slice %13 {offsets = [0, 32], sizes = [16, 8], strides = [1, 1]} : vector<16x96xf32> to vector<16x8xf32>
    %17 = vector.shape_cast %16 : vector<16x8xf32> to vector<2x8x8xf32>
    %18 = vector.extract_strided_slice %13 {offsets = [0, 64], sizes = [16, 8], strides = [1, 1]} : vector<16x96xf32> to vector<16x8xf32>
    %19 = vector.shape_cast %18 : vector<16x8xf32> to vector<2x8x8xf32>
    "tpu.trace_start"() <{level = 10 : i32, message = "bqd,bkd->bqk"}> : () -> ()
    %cst_5 = arith.constant dense<0.000000e+00> : vector<2x8x8xf32>
    %20 = tpu.matmul %15, %17, %cst_5 {dimension_numbers = #tpu.dot_dimension_numbers<[2], [2], [1], [1], [0, 0, 0, 1, 1, 1], [0], [0]>} : vector<2x8x8xf32>, vector<2x8x8xf32>, vector<2x8x8xf32> -> vector<2x8x8xf32>
    "tpu.trace_stop"() : () -> ()
    %21 = vector.extract_strided_slice %13 {offsets = [0, 8], sizes = [16, 8], strides = [1, 1]} : vector<16x96xf32> to vector<16x8xf32>
    %22 = vector.shape_cast %21 : vector<16x8xf32> to vector<2x8x8xf32>
    %23 = vector.extract_strided_slice %13 {offsets = [0, 40], sizes = [16, 8], strides = [1, 1]} : vector<16x96xf32> to vector<16x8xf32>
    %24 = vector.shape_cast %23 : vector<16x8xf32> to vector<2x8x8xf32>
    %25 = vector.extract_strided_slice %13 {offsets = [0, 72], sizes = [16, 8], strides = [1, 1]} : vector<16x96xf32> to vector<16x8xf32>
    %26 = vector.shape_cast %25 : vector<16x8xf32> to vector<2x8x8xf32>
    "tpu.trace_start"() <{level = 10 : i32, message = "bqd,bkd->bqk"}> : () -> ()
    %cst_6 = arith.constant dense<0.000000e+00> : vector<2x8x8xf32>
    %27 = tpu.matmul %22, %24, %cst_6 {dimension_numbers = #tpu.dot_dimension_numbers<[2], [2], [1], [1], [0, 0, 0, 1, 1, 1], [0], [0]>} : vector<2x8x8xf32>, vector<2x8x8xf32>, vector<2x8x8xf32> -> vector<2x8x8xf32>
    "tpu.trace_stop"() : () -> ()
    %28 = vector.extract_strided_slice %13 {offsets = [0, 16], sizes = [16, 8], strides = [1, 1]} : vector<16x96xf32> to vector<16x8xf32>
    %29 = vector.shape_cast %28 : vector<16x8xf32> to vector<2x8x8xf32>
    %30 = vector.extract_strided_slice %13 {offsets = [0, 48], sizes = [16, 8], strides = [1, 1]} : vector<16x96xf32> to vector<16x8xf32>
    %31 = vector.shape_cast %30 : vector<16x8xf32> to vector<2x8x8xf32>
    %32 = vector.extract_strided_slice %13 {offsets = [0, 80], sizes = [16, 8], strides = [1, 1]} : vector<16x96xf32> to vector<16x8xf32>
    %33 = vector.shape_cast %32 : vector<16x8xf32> to vector<2x8x8xf32>
    "tpu.trace_start"() <{level = 10 : i32, message = "bqd,bkd->bqk"}> : () -> ()
    %cst_7 = arith.constant dense<0.000000e+00> : vector<2x8x8xf32>
    %34 = tpu.matmul %29, %31, %cst_7 {dimension_numbers = #tpu.dot_dimension_numbers<[2], [2], [1], [1], [0, 0, 0, 1, 1, 1], [0], [0]>} : vector<2x8x8xf32>, vector<2x8x8xf32>, vector<2x8x8xf32> -> vector<2x8x8xf32>
    "tpu.trace_stop"() : () -> ()
    %35 = vector.extract_strided_slice %13 {offsets = [0, 24], sizes = [16, 8], strides = [1, 1]} : vector<16x96xf32> to vector<16x8xf32>
    %36 = vector.shape_cast %35 : vector<16x8xf32> to vector<2x8x8xf32>
    %37 = vector.extract_strided_slice %13 {offsets = [0, 56], sizes = [16, 8], strides = [1, 1]} : vector<16x96xf32> to vector<16x8xf32>
    %38 = vector.shape_cast %37 : vector<16x8xf32> to vector<2x8x8xf32>
    %39 = vector.extract_strided_slice %13 {offsets = [0, 88], sizes = [16, 8], strides = [1, 1]} : vector<16x96xf32> to vector<16x8xf32>
    %40 = vector.shape_cast %39 : vector<16x8xf32> to vector<2x8x8xf32>
    "tpu.trace_start"() <{level = 10 : i32, message = "bqd,bkd->bqk"}> : () -> ()
    %cst_8 = arith.constant dense<0.000000e+00> : vector<2x8x8xf32>
    %41 = tpu.matmul %36, %38, %cst_8 {dimension_numbers = #tpu.dot_dimension_numbers<[2], [2], [1], [1], [0, 0, 0, 1, 1, 1], [0], [0]>} : vector<2x8x8xf32>, vector<2x8x8xf32>, vector<2x8x8xf32> -> vector<2x8x8xf32>
    "tpu.trace_stop"() : () -> ()
    %42 = tpu.concatenate %20, %27, %34, %41 in 1 : vector<2x8x8xf32>, vector<2x8x8xf32>, vector<2x8x8xf32>, vector<2x8x8xf32> -> vector<2x32x8xf32>
    %cst_9 = arith.constant 0.353553385 : f32
    %43 = vector.broadcast %cst_9 : f32 to vector<2x32x8xf32>
    %44 = arith.mulf %42, %43 : vector<2x32x8xf32>
    %cst_10 = arith.constant dense<0xFF800000> : vector<2x32xf32>
    %45 = vector.multi_reduction <maximumf>, %44, %cst_10 [2] : vector<2x32x8xf32> to vector<2x32xf32>
    %46 = vector.shape_cast %45 : vector<2x32xf32> to vector<2x32x1xf32>
    %47 = vector.broadcast %46 : vector<2x32x1xf32> to vector<2x32x8xf32>
    %48 = arith.subf %44, %47 : vector<2x32x8xf32>
    %49 = math.exp %48 : vector<2x32x8xf32>
    %cst_11 = arith.constant dense<0.000000e+00> : vector<2x32xf32>
    %50 = vector.multi_reduction <add>, %49, %cst_11 [2] : vector<2x32x8xf32> to vector<2x32xf32>
    %51 = vector.shape_cast %50 : vector<2x32xf32> to vector<2x32x1xf32>
    %52 = tpu.reciprocal %51 {approx = true} : vector<2x32x1xf32> -> vector<2x32x1xf32>
    %53 = vector.broadcast %52 : vector<2x32x1xf32> to vector<2x32x8xf32>
    %54 = arith.mulf %49, %53 : vector<2x32x8xf32>
    %55 = vector.extract_strided_slice %54 {offsets = [0, 0, 0], sizes = [2, 8, 8], strides = [1, 1, 1]} : vector<2x32x8xf32> to vector<2x8x8xf32>
    "tpu.trace_start"() <{level = 10 : i32, message = "bqk,bkd->bqd"}> : () -> ()
    %cst_12 = arith.constant dense<0.000000e+00> : vector<2x8x8xf32>
    %56 = tpu.matmul %55, %19, %cst_12 {dimension_numbers = #tpu.dot_dimension_numbers<[2], [1], [1], [2], [0, 0, 0, 1, 1, 2], [0], [0]>} : vector<2x8x8xf32>, vector<2x8x8xf32>, vector<2x8x8xf32> -> vector<2x8x8xf32>
    "tpu.trace_stop"() : () -> ()
    %57 = vector.shape_cast %56 : vector<2x8x8xf32> to vector<16x8xf32>
    %c0_13 = arith.constant 0 : index
    %c0_14 = arith.constant 0 : index
    %58 = vector.load %arg2[%c0_13, %c0_14] : memref<32x32xf32, #tpu.memory_space<vmem>>, vector<8x32xf32>
    %cst_15 = arith.constant dense<0.000000e+00> : vector<16x32xf32>
    %59 = tpu.matmul %57, %58, %cst_15 {dimension_numbers = #tpu.dot_dimension_numbers<[1], [0], [0], [1], [0, 0, 1, 1], [], []>} : vector<16x8xf32>, vector<8x32xf32>, vector<16x32xf32> -> vector<16x32xf32>
    %60 = vector.extract_strided_slice %54 {offsets = [0, 8, 0], sizes = [2, 8, 8], strides = [1, 1, 1]} : vector<2x32x8xf32> to vector<2x8x8xf32>
    "tpu.trace_start"() <{level = 10 : i32, message = "bqk,bkd->bqd"}> : () -> ()
    %cst_16 = arith.constant dense<0.000000e+00> : vector<2x8x8xf32>
    %61 = tpu.matmul %60, %26, %cst_16 {dimension_numbers = #tpu.dot_dimension_numbers<[2], [1], [1], [2], [0, 0, 0, 1, 1, 2], [0], [0]>} : vector<2x8x8xf32>, vector<2x8x8xf32>, vector<2x8x8xf32> -> vector<2x8x8xf32>
    "tpu.trace_stop"() : () -> ()
    %62 = vector.shape_cast %61 : vector<2x8x8xf32> to vector<16x8xf32>
    %c8 = arith.constant 8 : index
    %c0_17 = arith.constant 0 : index
    %63 = vector.load %arg2[%c8, %c0_17] : memref<32x32xf32, #tpu.memory_space<vmem>>, vector<8x32xf32>
    %cst_18 = arith.constant dense<0.000000e+00> : vector<16x32xf32>
    %64 = tpu.matmul %62, %63, %cst_18 {dimension_numbers = #tpu.dot_dimension_numbers<[1], [0], [0], [1], [0, 0, 1, 1], [], []>} : vector<16x8xf32>, vector<8x32xf32>, vector<16x32xf32> -> vector<16x32xf32>
    %65 = arith.addf %59, %64 : vector<16x32xf32>
    %66 = vector.extract_strided_slice %54 {offsets = [0, 16, 0], sizes = [2, 8, 8], strides = [1, 1, 1]} : vector<2x32x8xf32> to vector<2x8x8xf32>
    "tpu.trace_start"() <{level = 10 : i32, message = "bqk,bkd->bqd"}> : () -> ()
    %cst_19 = arith.constant dense<0.000000e+00> : vector<2x8x8xf32>
    %67 = tpu.matmul %66, %33, %cst_19 {dimension_numbers = #tpu.dot_dimension_numbers<[2], [1], [1], [2], [0, 0, 0, 1, 1, 2], [0], [0]>} : vector<2x8x8xf32>, vector<2x8x8xf32>, vector<2x8x8xf32> -> vector<2x8x8xf32>
    "tpu.trace_stop"() : () -> ()
    %68 = vector.shape_cast %67 : vector<2x8x8xf32> to vector<16x8xf32>
    %c16 = arith.constant 16 : index
    %c0_20 = arith.constant 0 : index
    %69 = vector.load %arg2[%c16, %c0_20] : memref<32x32xf32, #tpu.memory_space<vmem>>, vector<8x32xf32>
    %cst_21 = arith.constant dense<0.000000e+00> : vector<16x32xf32>
    %70 = tpu.matmul %68, %69, %cst_21 {dimension_numbers = #tpu.dot_dimension_numbers<[1], [0], [0], [1], [0, 0, 1, 1], [], []>} : vector<16x8xf32>, vector<8x32xf32>, vector<16x32xf32> -> vector<16x32xf32>
    %71 = arith.addf %65, %70 : vector<16x32xf32>
    %72 = vector.extract_strided_slice %54 {offsets = [0, 24, 0], sizes = [2, 8, 8], strides = [1, 1, 1]} : vector<2x32x8xf32> to vector<2x8x8xf32>
    "tpu.trace_start"() <{level = 10 : i32, message = "bqk,bkd->bqd"}> : () -> ()
    %cst_22 = arith.constant dense<0.000000e+00> : vector<2x8x8xf32>
    %73 = tpu.matmul %72, %40, %cst_22 {dimension_numbers = #tpu.dot_dimension_numbers<[2], [1], [1], [2], [0, 0, 0, 1, 1, 2], [0], [0]>} : vector<2x8x8xf32>, vector<2x8x8xf32>, vector<2x8x8xf32> -> vector<2x8x8xf32>
    "tpu.trace_stop"() : () -> ()
    %74 = vector.shape_cast %73 : vector<2x8x8xf32> to vector<16x8xf32>
    %c24 = arith.constant 24 : index
    %c0_23 = arith.constant 0 : index
    %75 = vector.load %arg2[%c24, %c0_23] : memref<32x32xf32, #tpu.memory_space<vmem>>, vector<8x32xf32>
    %cst_24 = arith.constant dense<0.000000e+00> : vector<16x32xf32>
    %76 = tpu.matmul %74, %75, %cst_24 {dimension_numbers = #tpu.dot_dimension_numbers<[1], [0], [0], [1], [0, 0, 1, 1], [], []>} : vector<16x8xf32>, vector<8x32xf32>, vector<16x32xf32> -> vector<16x32xf32>
    %77 = arith.addf %71, %76 : vector<16x32xf32>
    %78 = arith.addf %0, %77 : vector<16x32xf32>
    %79 = vector.broadcast %3 : vector<1x32xf32> to vector<16x32xf32>
    %80 = arith.addf %78, %79 : vector<16x32xf32>
    %cst_25 = arith.constant dense<0.000000e+00> : vector<16xf32>
    %81 = vector.multi_reduction <add>, %80, %cst_25 [1] : vector<16x32xf32> to vector<16xf32>
    %82 = vector.shape_cast %81 : vector<16xf32> to vector<16x1xf32>
    %cst_26 = arith.constant 3.200000e+01 : f32
    %83 = vector.broadcast %cst_26 : f32 to vector<16x1xf32>
    %84 = arith.divf %82, %83 : vector<16x1xf32>
    %85 = vector.broadcast %84 : vector<16x1xf32> to vector<16x32xf32>
    %86 = arith.subf %80, %85 : vector<16x32xf32>
    %87 = arith.mulf %86, %86 : vector<16x32xf32>
    %cst_27 = arith.constant dense<0.000000e+00> : vector<16xf32>
    %88 = vector.multi_reduction <add>, %87, %cst_27 [1] : vector<16x32xf32> to vector<16xf32>
    %89 = vector.shape_cast %88 : vector<16xf32> to vector<16x1xf32>
    %cst_28 = arith.constant 3.200000e+01 : f32
    %90 = vector.broadcast %cst_28 : f32 to vector<16x1xf32>
    %91 = arith.divf %89, %90 : vector<16x1xf32>
    %92 = vector.broadcast %84 : vector<16x1xf32> to vector<16x32xf32>
    %93 = arith.subf %80, %92 : vector<16x32xf32>
    %cst_29 = arith.constant 9.99999974E-6 : f32
    %94 = vector.broadcast %cst_29 : f32 to vector<16x1xf32>
    %95 = arith.addf %91, %94 : vector<16x1xf32>
    %96 = math.rsqrt %95 : vector<16x1xf32>
    %97 = vector.broadcast %96 : vector<16x1xf32> to vector<16x32xf32>
    %98 = arith.mulf %93, %97 : vector<16x32xf32>
    %99 = vector.broadcast %6 : vector<1x32xf32> to vector<16x32xf32>
    %100 = arith.mulf %98, %99 : vector<16x32xf32>
    %101 = vector.broadcast %7 : vector<1x32xf32> to vector<16x32xf32>
    %102 = arith.addf %100, %101 : vector<16x32xf32>
    %c0_30 = arith.constant 0 : index
    %c0_31 = arith.constant 0 : index
    %103 = vector.load %arg3[%c0_30, %c0_31] : memref<32x64xf32, #tpu.memory_space<vmem>>, vector<32x64xf32>
    %cst_32 = arith.constant dense<0.000000e+00> : vector<16x64xf32>
    %104 = tpu.matmul %102, %103, %cst_32 {dimension_numbers = #tpu.dot_dimension_numbers<[1], [0], [0], [1], [0, 0, 1, 1], [], []>} : vector<16x32xf32>, vector<32x64xf32>, vector<16x64xf32> -> vector<16x64xf32>
    %105 = vector.broadcast %4 : vector<1x64xf32> to vector<16x64xf32>
    %106 = arith.addf %104, %105 : vector<16x64xf32>
    %cst_33 = arith.constant 0.000000e+00 : f32
    %107 = vector.broadcast %cst_33 : f32 to vector<16x64xf32>
    %108 = arith.maximumf %106, %107 : vector<16x64xf32>
    %c0_34 = arith.constant 0 : index
    %c0_35 = arith.constant 0 : index
    %109 = vector.load %arg4[%c0_34, %c0_35] : memref<64x32xf32, #tpu.memory_space<vmem>>, vector<64x32xf32>
    %cst_36 = arith.constant dense<0.000000e+00> : vector<16x32xf32>
    %110 = tpu.matmul %108, %109, %cst_36 {dimension_numbers = #tpu.dot_dimension_numbers<[1], [0], [0], [1], [0, 0, 1, 1], [], []>} : vector<16x64xf32>, vector<64x32xf32>, vector<16x32xf32> -> vector<16x32xf32>
    %111 = vector.broadcast %5 : vector<1x32xf32> to vector<16x32xf32>
    %112 = arith.addf %110, %111 : vector<16x32xf32>
    %113 = arith.addf %102, %112 : vector<16x32xf32>
    %cst_37 = arith.constant dense<0.000000e+00> : vector<16xf32>
    %114 = vector.multi_reduction <add>, %113, %cst_37 [1] : vector<16x32xf32> to vector<16xf32>
    %115 = vector.shape_cast %114 : vector<16xf32> to vector<16x1xf32>
    %cst_38 = arith.constant 3.200000e+01 : f32
    %116 = vector.broadcast %cst_38 : f32 to vector<16x1xf32>
    %117 = arith.divf %115, %116 : vector<16x1xf32>
    %118 = vector.broadcast %117 : vector<16x1xf32> to vector<16x32xf32>
    %119 = arith.subf %113, %118 : vector<16x32xf32>
    %120 = arith.mulf %119, %119 : vector<16x32xf32>
    %cst_39 = arith.constant dense<0.000000e+00> : vector<16xf32>
    %121 = vector.multi_reduction <add>, %120, %cst_39 [1] : vector<16x32xf32> to vector<16xf32>
    %122 = vector.shape_cast %121 : vector<16xf32> to vector<16x1xf32>
    %cst_40 = arith.constant 3.200000e+01 : f32
    %123 = vector.broadcast %cst_40 : f32 to vector<16x1xf32>
    %124 = arith.divf %122, %123 : vector<16x1xf32>
    %125 = vector.broadcast %117 : vector<16x1xf32> to vector<16x32xf32>
    %126 = arith.subf %113, %125 : vector<16x32xf32>
    %cst_41 = arith.constant 9.99999974E-6 : f32
    %127 = vector.broadcast %cst_41 : f32 to vector<16x1xf32>
    %128 = arith.addf %124, %127 : vector<16x1xf32>
    %129 = math.rsqrt %128 : vector<16x1xf32>
    %130 = vector.broadcast %129 : vector<16x1xf32> to vector<16x32xf32>
    %131 = arith.mulf %126, %130 : vector<16x32xf32>
    %132 = vector.broadcast %8 : vector<1x32xf32> to vector<16x32xf32>
    %133 = arith.mulf %131, %132 : vector<16x32xf32>
    %134 = vector.broadcast %9 : vector<1x32xf32> to vector<16x32xf32>
    %135 = arith.addf %133, %134 : vector<16x32xf32>
    %c0_42 = arith.constant 0 : index
    %c0_43 = arith.constant 0 : index
    %136 = vector.load %arg6[%c0_42, %c0_43] : memref<16x32xf32, #tpu.memory_space<vmem>>, vector<16x32xf32>
    tpu.vector_store %arg6[%c0_42, %c0_43], %135 {strides = array<i32>} : memref<16x32xf32, #tpu.memory_space<vmem>>, vector<16x32xf32>,
    return
  }
}

</mosaic_0001>

<llo_original>
// kernel: post_norm_logic.1
$region0: #{post_norm_logic.1}
  #allocation0 [shape = 'u32[]', space=smem, size = 0x4, offset = 0x4, fixed_abs, tag = 'smem constant byte address 0x4 - core index']
  #allocation1 [shape = 'u32[72,128]{1,0:T(1,128)}', space=vmem, size = 0x9000, scoped, tag = 'internal scratch']
  %s0 = inlined_call_operand.hbm [shape: f32[16,32], index: 0, kind: input, shape index: {}]
  %s1 = inlined_call_operand.vmem [shape: f32[32,96], index: 1, kind: input, shape index: {}]
  %s2 = inlined_call_operand.vmem [shape: f32[32,32], index: 2, kind: input, shape index: {}]
  %s3 = inlined_call_operand.vmem [shape: f32[32,64], index: 3, kind: input, shape index: {}]
  %s4 = inlined_call_operand.vmem [shape: f32[64,32], index: 4, kind: input, shape index: {}]
  %s5 = inlined_call_operand.hbm [shape: f32[8,128], index: 5, kind: input, shape index: {}]
  %s6 = inlined_call_operand.hbm [shape: f32[16,32], index: 6, kind: output, shape index: {}]
  %s7 = sld [smem:[#allocation0]]
  $region42: #{post_norm_logic.1} parent=0
    _
  %s9 = ssub.s32 1, %s7
  %s10 = scalar_select 0, %s9, %s7
  $region1: #{post_norm_logic.1} parent=0
    #allocation2 [shape = 'u8[8192]{0}', space=vmem, size = 0x2000, scoped, tag = 'input window, operand 0, single buffered']
    #allocation3 [shape = 's32[1]{0}', space=sflag, size = 0x4, scoped, tag = 'scoped memory for post_norm_logic.1']
    #allocation4 [shape = 's32[1]{0}', space=sflag, size = 0x4, scoped, tag = 'scoped memory for post_norm_logic.1']
    #allocation5 [shape = 'u8[4096]{0}', space=vmem, size = 0x1000, scoped, tag = 'input window, operand 5, single buffered']
    #allocation6 [shape = 's32[1]{0}', space=sflag, size = 0x4, scoped, tag = 'scoped memory for post_norm_logic.1']
    #allocation7 [shape = 'u8[8192]{0}', space=vmem, size = 0x2000, scoped, tag = 'output window, operand 0, single buffered']
    %11 = vsyncpa [#allocation3], 0
    %12 = vsyncpa [#allocation6], 0
    %13 = vsyncpa [#allocation4], 0
    // Predicated region
    $region2: #{post_norm_logic.1} parent=1 // pred_check
      _
    $region3: #{post_norm_logic.1} parent=1 // pred_check_branch
      %15 = sbr.rel (0) target = $region5
    $region4: #{post_norm_logic.1} parent=1 // pred_region
      %17 = vsyncadd [#allocation3], 0
      %s18 = sshll.u32 %s0, 4
      %s19 = int_to_ptr.hbm [resolvable:$true] %s18
      %s20 = sshll.u32 [#allocation2], 4
      %s21 = int_to_ptr.vmem [resolvable:$true] %s20
      %26 = dma.hbm_to_vmem [thread:$0]  %s19, 256, %s21, [#allocation3], 128, 128, 8
    $region5: #{post_norm_logic.1} parent=1 // pred_fallthru
      _
    // Predicated region
    $region6: #{post_norm_logic.1} parent=1 // pred_check
      _
    $region7: #{post_norm_logic.1} parent=1 // pred_check_branch
      %28 = sbr.rel (0) target = $region9
    $region8: #{post_norm_logic.1} parent=1 // pred_region
      _
    $region9: #{post_norm_logic.1} parent=1 // pred_fallthru
      _
    // Predicated region
    $region10: #{post_norm_logic.1} parent=1 // pred_check
      _
    $region11: #{post_norm_logic.1} parent=1 // pred_check_branch
      %30 = sbr.rel (0) target = $region13
    $region12: #{post_norm_logic.1} parent=1 // pred_region
      _
    $region13: #{post_norm_logic.1} parent=1 // pred_fallthru
      _
    // Predicated region
    $region14: #{post_norm_logic.1} parent=1 // pred_check
      _
    $region15: #{post_norm_logic.1} parent=1 // pred_check_branch
      %32 = sbr.rel (0) target = $region17
    $region16: #{post_norm_logic.1} parent=1 // pred_region
      _
    $region17: #{post_norm_logic.1} parent=1 // pred_fallthru
      _
    // Predicated region
    $region18: #{post_norm_logic.1} parent=1 // pred_check
      _
    $region19: #{post_norm_logic.1} parent=1 // pred_check_branch
      %34 = sbr.rel (0) target = $region21
    $region20: #{post_norm_logic.1} parent=1 // pred_region
      _
    $region21: #{post_norm_logic.1} parent=1 // pred_fallthru
      _
    // Predicated region
    $region22: #{post_norm_logic.1} parent=1 // pred_check
      _
    $region23: #{post_norm_logic.1} parent=1 // pred_check_branch
      %36 = sbr.rel (0) target = $region25
    $region24: #{post_norm_logic.1} parent=1 // pred_region
      %38 = vsyncadd [#allocation6], 0
      %s40 = sshll.u32 %s5, 4
      %s41 = int_to_ptr.hbm [resolvable:$true] %s40
      %s42 = sshll.u32 [#allocation5], 4
      %s43 = int_to_ptr.vmem [resolvable:$true] %s42
      %45 = dma.hbm_to_vmem [thread:$0]  %s41, 128, %s43, [#allocation6]
    $region25: #{post_norm_logic.1} parent=1 // pred_fallthru
      _
    // Predicated region
    $region26: #{post_norm_logic.1} parent=1 // pred_check
      _
    $region27: #{post_norm_logic.1} parent=1 // pred_check_branch
      %47 = sbr.rel (0) target = $region29
    $region28: #{post_norm_logic.1} parent=1 // pred_region
      %49 = dma.done [#allocation3], 256
    $region29: #{post_norm_logic.1} parent=1 // pred_fallthru
      _
    // Predicated region
    $region30: #{post_norm_logic.1} parent=1 // pred_check
      _
    $region31: #{post_norm_logic.1} parent=1 // pred_check_branch
      %51 = sbr.rel (0) target = $region33
    $region32: #{post_norm_logic.1} parent=1 // pred_region
      %53 = dma.done [#allocation6], 128
    $region33: #{post_norm_logic.1} parent=1 // pred_fallthru
      _
    %v54 = vld [vmem:[#allocation2] sm:$0xff]
    %v55 = vld [vmem:[#allocation2 + $0x8] sm:$0xff]
    %v56 = vld [vmem:[#allocation5] sm:$0xff]
    %v57 = vld [vmem:[%s1] sm:$0xff]
    %v58 = vld [vmem:[%s1 + $0x8] sm:$0xff]
    %v59 = vld [vmem:[%s1 + $0x10] sm:$0xff]
    %v60 = vld [vmem:[%s1 + $0x18] sm:$0xff]
    %v61 = vperm.slane %v56, 0
    %vm62 = vcmask 261120
    %v64 = vsel %vm62, %v54, 0
    %v67 = vsel %vm62, %v55, 0
    %69 = vmatpush.msra.mxu0 0.0
    %70 = vmatpush.msra.mxu0 0.0
    %71 = vmatpush.msra.mxu0 0.0
    %72 = vmatpush.msra.mxu0 0.0
    %73 = vmatpush.msra.mxu0 0.0
    %74 = vmatpush.msra.mxu0 0.0
    %75 = vmatpush.msra.mxu0 0.0
    %76 = vmatpush.msra.mxu0 0.0
    %77 = vmatpush.msra.mxu0 0.0
    %78 = vmatpush.msra.mxu0 0.0
    %79 = vmatpush.msra.mxu0 0.0
    %80 = vmatpush.msra.mxu0 0.0
    %81 = vmatpush.msra.mxu0 %v60
    %82 = vmatpush.msra.mxu0 %v59
    %83 = vmatpush.msra.mxu0 %v58
    %84 = vmatpush.msra.mxu0 %v57
    %85 = vmatmul.f32.gmra.mxu0 %v64
    %v86 = vpop.f32.mrf.mxu0
    %v87 = vadd.f32 %v61, %v86
    %88 = vmatmul.f32.gmra.mxu0 %v67
    %v89 = vpop.f32.mrf.mxu0
    %v90 = vadd.f32 %v61, %v89
    %91 = vdwg.mxu0
    %93 = vrot.lane.b32.xlu0 %v87, 96
    %v94 = vpop.permute.xlu0 %93
    %vm95 = vcmask 64512
    %v96 = vsel %vm95, %v87, 0
    %v98 = vsel %vm95, %v94, 0
    %100 = vmatpush.xpose.msra.mxu0 0.0
    %101 = vmatpush.xpose.msra.mxu0 0.0
    %102 = vmatpush.xpose.msra.mxu0 0.0
    %103 = vmatpush.xpose.msra.mxu0 0.0
    %104 = vmatpush.xpose.msra.mxu0 0.0
    %105 = vmatpush.xpose.msra.mxu0 0.0
    %106 = vmatpush.xpose.msra.mxu0 0.0
    %107 = vmatpush.xpose.msra.mxu0 0.0
    %108 = vmatpush.xpose.msra.mxu0 0.0
    %109 = vmatpush.xpose.msra.mxu0 0.0
    %110 = vmatpush.xpose.msra.mxu0 0.0
    %111 = vmatpush.xpose.msra.mxu0 0.0
    %112 = vmatpush.xpose.msra.mxu0 0.0
    %113 = vmatpush.xpose.msra.mxu0 0.0
    %114 = vmatpush.xpose.msra.mxu0 0.0
    %115 = vmatpush.xpose.msra.mxu0 %v98
    %116 = vmatmul.f32.gmra.mxu0 %v96
    %v117 = vpop.f32.mrf.mxu0
    %v118 = vadd.f32 0.0, %v117
    %119 = vdwg.mxu0
    %121 = vrot.lane.b32.xlu0 %v90, 96
    %v122 = vpop.permute.xlu0 %121
    %v123 = vsel %vm95, %v90, 0
    %v125 = vsel %vm95, %v122, 0
    %127 = vmatpush.xpose.msra.mxu0 0.0
    %128 = vmatpush.xpose.msra.mxu0 0.0
    %129 = vmatpush.xpose.msra.mxu0 0.0
    %130 = vmatpush.xpose.msra.mxu0 0.0
    %131 = vmatpush.xpose.msra.mxu0 0.0
    %132 = vmatpush.xpose.msra.mxu0 0.0
    %133 = vmatpush.xpose.msra.mxu0 0.0
    %134 = vmatpush.xpose.msra.mxu0 0.0
    %135 = vmatpush.xpose.msra.mxu0 0.0
    %136 = vmatpush.xpose.msra.mxu0 0.0
    %137 = vmatpush.xpose.msra.mxu0 0.0
    %138 = vmatpush.xpose.msra.mxu0 0.0
    %139 = vmatpush.xpose.msra.mxu0 0.0
    %140 = vmatpush.xpose.msra.mxu0 0.0
    %141 = vmatpush.xpose.msra.mxu0 0.0
    %142 = vmatpush.xpose.msra.mxu0 %v125
    %143 = vmatmul.f32.gmra.mxu0 %v123
    %v144 = vpop.f32.mrf.mxu0
    %v145 = vadd.f32 0.0, %v144
    %146 = vdwg.mxu0
    %147 = vrot.lane.b32.xlu0 %v87, 120
    %v148 = vpop.permute.xlu0 %147
    %149 = vrot.lane.b32.xlu0 %v87, 88
    %v150 = vpop.permute.xlu0 %149
    %v151 = vsel %vm95, %v148, 0
    %v153 = vsel %vm95, %v150, 0
    %155 = vmatpush.xpose.msra.mxu0 0.0
    %156 = vmatpush.xpose.msra.mxu0 0.0
    %157 = vmatpush.xpose.msra.mxu0 0.0
    %158 = vmatpush.xpose.msra.mxu0 0.0
    %159 = vmatpush.xpose.msra.mxu0 0.0
    %160 = vmatpush.xpose.msra.mxu0 0.0
    %161 = vmatpush.xpose.msra.mxu0 0.0
    %162 = vmatpush.xpose.msra.mxu0 0.0
    %163 = vmatpush.xpose.msra.mxu0 0.0
    %164 = vmatpush.xpose.msra.mxu0 0.0
    %165 = vmatpush.xpose.msra.mxu0 0.0
    %166 = vmatpush.xpose.msra.mxu0 0.0
    %167 = vmatpush.xpose.msra.mxu0 0.0
    %168 = vmatpush.xpose.msra.mxu0 0.0
    %169 = vmatpush.xpose.msra.mxu0 0.0
    %170 = vmatpush.xpose.msra.mxu0 %v153
    %171 = vmatmul.f32.gmra.mxu0 %v151
    %v172 = vpop.f32.mrf.mxu0
    %v173 = vadd.f32 0.0, %v172
    %174 = vdwg.mxu0
    %175 = vrot.lane.b32.xlu0 %v90, 120
    %v176 = vpop.permute.xlu0 %175
    %177 = vrot.lane.b32.xlu0 %v90, 88
    %v178 = vpop.permute.xlu0 %177
    %v179 = vsel %vm95, %v176, 0
    %v181 = vsel %vm95, %v178, 0
    %183 = vmatpush.xpose.msra.mxu0 0.0
    %184 = vmatpush.xpose.msra.mxu0 0.0
    %185 = vmatpush.xpose.msra.mxu0 0.0
    %186 = vmatpush.xpose.msra.mxu0 0.0
    %187 = vmatpush.xpose.msra.mxu0 0.0
    %188 = vmatpush.xpose.msra.mxu0 0.0
    %189 = vmatpush.xpose.msra.mxu0 0.0
    %190 = vmatpush.xpose.msra.mxu0 0.0
    %191 = vmatpush.xpose.msra.mxu0 0.0
    %192 = vmatpush.xpose.msra.mxu0 0.0
    %193 = vmatpush.xpose.msra.mxu0 0.0
    %194 = vmatpush.xpose.msra.mxu0 0.0
    %195 = vmatpush.xpose.msra.mxu0 0.0
    %196 = vmatpush.xpose.msra.mxu0 0.0
    %197 = vmatpush.xpose.msra.mxu0 0.0
    %198 = vmatpush.xpose.msra.mxu0 %v181
    %199 = vmatmul.f32.gmra.mxu0 %v179
    %v200 = vpop.f32.mrf.mxu0
    %v201 = vadd.f32 0.0, %v200
    %202 = vdwg.mxu0
    %203 = vrot.lane.b32.xlu0 %v87, 112
    %v204 = vpop.permute.xlu0 %203
    %205 = vrot.lane.b32.xlu0 %v87, 80
    %v206 = vpop.permute.xlu0 %205
    %v207 = vsel %vm95, %v204, 0
    %v209 = vsel %vm95, %v206, 0
    %211 = vmatpush.xpose.msra.mxu0 0.0
    %212 = vmatpush.xpose.msra.mxu0 0.0
    %213 = vmatpush.xpose.msra.mxu0 0.0
    %214 = vmatpush.xpose.msra.mxu0 0.0
    %215 = vmatpush.xpose.msra.mxu0 0.0
    %216 = vmatpush.xpose.msra.mxu0 0.0
    %217 = vmatpush.xpose.msra.mxu0 0.0
    %218 = vmatpush.xpose.msra.mxu0 0.0
    %219 = vmatpush.xpose.msra.mxu0 0.0
    %220 = vmatpush.xpose.msra.mxu0 0.0
    %221 = vmatpush.xpose.msra.mxu0 0.0
    %222 = vmatpush.xpose.msra.mxu0 0.0
    %223 = vmatpush.xpose.msra.mxu0 0.0
    %224 = vmatpush.xpose.msra.mxu0 0.0
    %225 = vmatpush.xpose.msra.mxu0 0.0
    %226 = vmatpush.xpose.msra.mxu0 %v209
    %227 = vmatmul.f32.gmra.mxu0 %v207
    %v228 = vpop.f32.mrf.mxu0
    %v229 = vadd.f32 0.0, %v228
    %230 = vdwg.mxu0
    %231 = vrot.lane.b32.xlu0 %v90, 112
    %v232 = vpop.permute.xlu0 %231
    %233 = vrot.lane.b32.xlu0 %v90, 80
    %v234 = vpop.permute.xlu0 %233
    %v235 = vsel %vm95, %v232, 0
    %v237 = vsel %vm95, %v234, 0
    %239 = vmatpush.xpose.msra.mxu0 0.0
    %240 = vmatpush.xpose.msra.mxu0 0.0
    %241 = vmatpush.xpose.msra.mxu0 0.0
    %242 = vmatpush.xpose.msra.mxu0 0.0
    %243 = vmatpush.xpose.msra.mxu0 0.0
    %244 = vmatpush.xpose.msra.mxu0 0.0
    %245 = vmatpush.xpose.msra.mxu0 0.0
    %246 = vmatpush.xpose.msra.mxu0 0.0
    %247 = vmatpush.xpose.msra.mxu0 0.0
    %248 = vmatpush.xpose.msra.mxu0 0.0
    %249 = vmatpush.xpose.msra.mxu0 0.0
    %250 = vmatpush.xpose.msra.mxu0 0.0
    %251 = vmatpush.xpose.msra.mxu0 0.0
    %252 = vmatpush.xpose.msra.mxu0 0.0
    %253 = vmatpush.xpose.msra.mxu0 0.0
    %254 = vmatpush.xpose.msra.mxu0 %v237
    %255 = vmatmul.f32.gmra.mxu0 %v235
    %v256 = vpop.f32.mrf.mxu0
    %v257 = vadd.f32 0.0, %v256
    %258 = vdwg.mxu0
    %259 = vrot.lane.b32.xlu0 %v87, 104
    %v260 = vpop.permute.xlu0 %259
    %261 = vrot.lane.b32.xlu0 %v87, 72
    %v262 = vpop.permute.xlu0 %261
    %v263 = vsel %vm95, %v260, 0
    %v265 = vsel %vm95, %v262, 0
    %267 = vmatpush.xpose.msra.mxu0 0.0
    %268 = vmatpush.xpose.msra.mxu0 0.0
    %269 = vmatpush.xpose.msra.mxu0 0.0
    %270 = vmatpush.xpose.msra.mxu0 0.0
    %271 = vmatpush.xpose.msra.mxu0 0.0
    %272 = vmatpush.xpose.msra.mxu0 0.0
    %273 = vmatpush.xpose.msra.mxu0 0.0
    %274 = vmatpush.xpose.msra.mxu0 0.0
    %275 = vmatpush.xpose.msra.mxu0 0.0
    %276 = vmatpush.xpose.msra.mxu0 0.0
    %277 = vmatpush.xpose.msra.mxu0 0.0
    %278 = vmatpush.xpose.msra.mxu0 0.0
    %279 = vmatpush.xpose.msra.mxu0 0.0
    %280 = vmatpush.xpose.msra.mxu0 0.0
    %281 = vmatpush.xpose.msra.mxu0 0.0
    %282 = vmatpush.xpose.msra.mxu0 %v265
    %283 = vmatmul.f32.gmra.mxu0 %v263
    %v284 = vpop.f32.mrf.mxu0
    %v285 = vadd.f32 0.0, %v284
    %286 = vdwg.mxu0
    %287 = vrot.lane.b32.xlu0 %v90, 104
    %v288 = vpop.permute.xlu0 %287
    %289 = vrot.lane.b32.xlu0 %v90, 72
    %v290 = vpop.permute.xlu0 %289
    %v291 = vsel %vm95, %v288, 0
    %v293 = vsel %vm95, %v290, 0
    %295 = vmatpush.xpose.msra.mxu0 0.0
    %296 = vmatpush.xpose.msra.mxu0 0.0
    %297 = vmatpush.xpose.msra.mxu0 0.0
    %298 = vmatpush.xpose.msra.mxu0 0.0
    %299 = vmatpush.xpose.msra.mxu0 0.0
    %300 = vmatpush.xpose.msra.mxu0 0.0
    %301 = vmatpush.xpose.msra.mxu0 0.0
    %302 = vmatpush.xpose.msra.mxu0 0.0
    %303 = vmatpush.xpose.msra.mxu0 0.0
    %304 = vmatpush.xpose.msra.mxu0 0.0
    %305 = vmatpush.xpose.msra.mxu0 0.0
    %306 = vmatpush.xpose.msra.mxu0 0.0
    %307 = vmatpush.xpose.msra.mxu0 0.0
    %308 = vmatpush.xpose.msra.mxu0 0.0
    %309 = vmatpush.xpose.msra.mxu0 0.0
    %310 = vmatpush.xpose.msra.mxu0 %v293
    %311 = vmatmul.f32.gmra.mxu0 %v291
    %v312 = vpop.f32.mrf.mxu0
    %v313 = vadd.f32 0.0, %v312
    %314 = vdwg.mxu0
    %v315 = vmul.f32 %v118, 0.35355338
    %v316 = vmul.f32 %v173, 0.35355338
    %v317 = vmul.f32 %v229, 0.35355338
    %v318 = vmul.f32 %v285, 0.35355338
    %v319 = vmul.f32 %v145, 0.35355338
    %v320 = vmul.f32 %v201, 0.35355338
    %v321 = vmul.f32 %v257, 0.35355338
    %v322 = vmul.f32 %v313, 0.35355338
    %v323 = vsel %vm95, %v315, -inf
    %324 = vmax.xlane.f32.xlu0 %v323
    %v325 = vpop.xlane.xlu0 %324
    %v326 = vsel %vm95, %v316, -inf
    %327 = vmax.xlane.f32.xlu0 %v326
    %v328 = vpop.xlane.xlu0 %327
    %v329 = vsel %vm95, %v317, -inf
    %330 = vmax.xlane.f32.xlu0 %v329
    %v331 = vpop.xlane.xlu0 %330
    %v332 = vsel %vm95, %v318, -inf
    %333 = vmax.xlane.f32.xlu0 %v332
    %v334 = vpop.xlane.xlu0 %333
    %v335 = vsel %vm95, %v319, -inf
    %336 = vmax.xlane.f32.xlu0 %v335
    %v337 = vpop.xlane.xlu0 %336
    %v338 = vsel %vm95, %v320, -inf
    %339 = vmax.xlane.f32.xlu0 %v338
    %v340 = vpop.xlane.xlu0 %339
    %v341 = vsel %vm95, %v321, -inf
    %342 = vmax.xlane.f32.xlu0 %v341
    %v343 = vpop.xlane.xlu0 %342
    %v344 = vsel %vm95, %v322, -inf
    %345 = vmax.xlane.f32.xlu0 %v344
    %v346 = vpop.xlane.xlu0 %345
    %v347 = vsub.f32 %v315, %v325
    %v348 = vsub.f32 %v316, %v328
    %v349 = vsub.f32 %v317, %v331
    %v350 = vsub.f32 %v318, %v334
    %v351 = vsub.f32 %v319, %v337
    %v352 = vsub.f32 %v320, %v340
    %v353 = vsub.f32 %v321, %v343
    %v354 = vsub.f32 %v322, %v346
    %v355 = vmul.f32 %v347, 1.442695
    %v356 = vpow.pop %v355
    %v357 = vmul.f32 %v348, 1.442695
    %v358 = vpow.pop %v357
    %v359 = vmul.f32 %v349, 1.442695
    %v360 = vpow.pop %v359
    %v361 = vmul.f32 %v350, 1.442695
    %v362 = vpow.pop %v361
    %v363 = vmul.f32 %v351, 1.442695
    %v364 = vpow.pop %v363
    %v365 = vmul.f32 %v352, 1.442695
    %v366 = vpow.pop %v365
    %v367 = vmul.f32 %v353, 1.442695
    %v368 = vpow.pop %v367
    %v369 = vmul.f32 %v354, 1.442695
    %v370 = vpow.pop %v369
    %v371 = vsel %vm95, %v356, 0.0
    %372 = vadd.xlane.f32.xlu0 %v371
    %v373 = vpop.xlane.xlu0 %372
    %v374 = vsel %vm95, %v358, 0.0
    %375 = vadd.xlane.f32.xlu0 %v374
    %v376 = vpop.xlane.xlu0 %375
    %v377 = vsel %vm95, %v360, 0.0
    %378 = vadd.xlane.f32.xlu0 %v377
    %v379 = vpop.xlane.xlu0 %378
    %v380 = vsel %vm95, %v362, 0.0
    %381 = vadd.xlane.f32.xlu0 %v380
    %v382 = vpop.xlane.xlu0 %381
    %v383 = vsel %vm95, %v364, 0.0
    %384 = vadd.xlane.f32.xlu0 %v383
    %v385 = vpop.xlane.xlu0 %384
    %v386 = vsel %vm95, %v366, 0.0
    %387 = vadd.xlane.f32.xlu0 %v386
    %v388 = vpop.xlane.xlu0 %387
    %v389 = vsel %vm95, %v368, 0.0
    %390 = vadd.xlane.f32.xlu0 %v389
    %v391 = vpop.xlane.xlu0 %390
    %v392 = vsel %vm95, %v370, 0.0
    %393 = vadd.xlane.f32.xlu0 %v392
    %v394 = vpop.xlane.xlu0 %393
    %v395 = vrcp.pop %v373
    %v396 = vrcp.pop %v376
    %v397 = vrcp.pop %v379
    %v398 = vrcp.pop %v382
    %v399 = vrcp.pop %v385
    %v400 = vrcp.pop %v388
    %v401 = vrcp.pop %v391
    %v402 = vrcp.pop %v394
    %v403 = vmul.f32 %v356, %v395
    %v404 = vmul.f32 %v358, %v396
    %v405 = vmul.f32 %v360, %v397
    %v406 = vmul.f32 %v362, %v398
    %v407 = vmul.f32 %v364, %v399
    %v408 = vmul.f32 %v366, %v400
    %v409 = vmul.f32 %v368, %v401
    %v410 = vmul.f32 %v370, %v402
    %411 = vrot.lane.b32.xlu0 %v87, 64
    %v412 = vpop.permute.xlu0 %411
    %v415 = vsel %vm95, %v403, 0
    %417 = vmatpush.msra.mxu0 0.0
    %418 = vmatpush.msra.mxu0 0.0
    %419 = vmatpush.msra.mxu0 0.0
    %420 = vmatpush.msra.mxu0 0.0
    %421 = vmatpush.msra.mxu0 0.0
    %422 = vmatpush.msra.mxu0 0.0
    %423 = vmatpush.msra.mxu0 0.0
    %424 = vmatpush.msra.mxu0 0.0
    %425 = vmatpush.msra.mxu0 0.0
    %426 = vmatpush.msra.mxu0 0.0
    %427 = vmatpush.msra.mxu0 0.0
    %428 = vmatpush.msra.mxu0 0.0
    %429 = vmatpush.msra.mxu0 0.0
    %430 = vmatpush.msra.mxu0 0.0
    %431 = vmatpush.msra.mxu0 0.0
    %432 = vmatpush.msra.mxu0 %v412
    %433 = vmatmul.f32.gmra.mxu0 %v415
    %v434 = vpop.f32.mrf.mxu0
    %v435 = vadd.f32 0.0, %v434
    %436 = vdwg.mxu0
    %437 = vrot.lane.b32.xlu0 %v90, 64
    %v438 = vpop.permute.xlu0 %437
    %v441 = vsel %vm95, %v407, 0
    %443 = vmatpush.msra.mxu0 0.0
    %444 = vmatpush.msra.mxu0 0.0
    %445 = vmatpush.msra.mxu0 0.0
    %446 = vmatpush.msra.mxu0 0.0
    %447 = vmatpush.msra.mxu0 0.0
    %448 = vmatpush.msra.mxu0 0.0
    %449 = vmatpush.msra.mxu0 0.0
    %450 = vmatpush.msra.mxu0 0.0
    %451 = vmatpush.msra.mxu0 0.0
    %452 = vmatpush.msra.mxu0 0.0
    %453 = vmatpush.msra.mxu0 0.0
    %454 = vmatpush.msra.mxu0 0.0
    %455 = vmatpush.msra.mxu0 0.0
    %456 = vmatpush.msra.mxu0 0.0
    %457 = vmatpush.msra.mxu0 0.0
    %458 = vmatpush.msra.mxu0 %v438
    %459 = vmatmul.f32.gmra.mxu0 %v441
    %v460 = vpop.f32.mrf.mxu0
    %v461 = vadd.f32 0.0, %v460
    %462 = vdwg.mxu0
    %v463 = vld [vmem:[%s2] sm:$0xff]
    %464 = vrot.lane.b32.xlu0 %v87, 56
    %v465 = vpop.permute.xlu0 %464
    %v468 = vsel %vm95, %v404, 0
    %470 = vmatpush.msra.mxu0 0.0
    %471 = vmatpush.msra.mxu0 0.0
    %472 = vmatpush.msra.mxu0 0.0
    %473 = vmatpush.msra.mxu0 0.0
    %474 = vmatpush.msra.mxu0 0.0
    %475 = vmatpush.msra.mxu0 0.0
    %476 = vmatpush.msra.mxu0 0.0
    %477 = vmatpush.msra.mxu0 0.0
    %478 = vmatpush.msra.mxu0 0.0
    %479 = vmatpush.msra.mxu0 0.0
    %480 = vmatpush.msra.mxu0 0.0
    %481 = vmatpush.msra.mxu0 0.0
    %482 = vmatpush.msra.mxu0 0.0
    %483 = vmatpush.msra.mxu0 0.0
    %484 = vmatpush.msra.mxu0 0.0
    %485 = vmatpush.msra.mxu0 %v465
    %486 = vmatmul.f32.gmra.mxu0 %v468
    %v487 = vpop.f32.mrf.mxu0
    %v488 = vadd.f32 0.0, %v487
    %489 = vdwg.mxu0
    %490 = vrot.lane.b32.xlu0 %v90, 56
    %v491 = vpop.permute.xlu0 %490
    %v494 = vsel %vm95, %v408, 0
    %496 = vmatpush.msra.mxu0 0.0
    %497 = vmatpush.msra.mxu0 0.0
    %498 = vmatpush.msra.mxu0 0.0
    %499 = vmatpush.msra.mxu0 0.0
    %500 = vmatpush.msra.mxu0 0.0
    %501 = vmatpush.msra.mxu0 0.0
    %502 = vmatpush.msra.mxu0 0.0
    %503 = vmatpush.msra.mxu0 0.0
    %504 = vmatpush.msra.mxu0 0.0
    %505 = vmatpush.msra.mxu0 0.0
    %506 = vmatpush.msra.mxu0 0.0
    %507 = vmatpush.msra.mxu0 0.0
    %508 = vmatpush.msra.mxu0 0.0
    %509 = vmatpush.msra.mxu0 0.0
    %510 = vmatpush.msra.mxu0 0.0
    %511 = vmatpush.msra.mxu0 %v491
    %512 = vmatmul.f32.gmra.mxu0 %v494
    %v513 = vpop.f32.mrf.mxu0
    %v514 = vadd.f32 0.0, %v513
    %515 = vdwg.mxu0
    %v516 = vld [vmem:[%s2 + $0x8] sm:$0xff]
    %v518 = vsel %vm95, %v488, 0
    %v521 = vsel %vm95, %v514, 0
    %523 = vmatpush.msra.mxu0 0.0
    %524 = vmatpush.msra.mxu0 0.0
    %525 = vmatpush.msra.mxu0 0.0
    %526 = vmatpush.msra.mxu0 0.0
    %527 = vmatpush.msra.mxu0 0.0
    %528 = vmatpush.msra.mxu0 0.0
    %529 = vmatpush.msra.mxu0 0.0
    %530 = vmatpush.msra.mxu0 0.0
    %531 = vmatpush.msra.mxu0 0.0
    %532 = vmatpush.msra.mxu0 0.0
    %533 = vmatpush.msra.mxu0 0.0
    %534 = vmatpush.msra.mxu0 0.0
    %535 = vmatpush.msra.mxu0 0.0
    %536 = vmatpush.msra.mxu0 0.0
    %537 = vmatpush.msra.mxu0 0.0
    %538 = vmatpush.msra.mxu0 %v516
    %539 = vmatmul.f32.gmra.mxu0 %v518
    %v540 = vpop.f32.mrf.mxu0
    %v541 = vadd.f32 0.0, %v540
    %542 = vmatmul.f32.gmra.mxu0 %v521
    %v543 = vpop.f32.mrf.mxu0
    %v544 = vadd.f32 0.0, %v543
    %545 = vdwg.mxu0
    %v547 = vsel %vm95, %v435, 0
    %v550 = vsel %vm95, %v461, 0
    %552 = vmatpush.msra.mxu0 0.0
    %553 = vmatpush.msra.mxu0 0.0
    %554 = vmatpush.msra.mxu0 0.0
    %555 = vmatpush.msra.mxu0 0.0
    %556 = vmatpush.msra.mxu0 0.0
    %557 = vmatpush.msra.mxu0 0.0
    %558 = vmatpush.msra.mxu0 0.0
    %559 = vmatpush.msra.mxu0 0.0
    %560 = vmatpush.msra.mxu0 0.0
    %561 = vmatpush.msra.mxu0 0.0
    %562 = vmatpush.msra.mxu0 0.0
    %563 = vmatpush.msra.mxu0 0.0
    %564 = vmatpush.msra.mxu0 0.0
    %565 = vmatpush.msra.mxu0 0.0
    %566 = vmatpush.msra.mxu0 0.0
    %567 = vmatpush.msra.mxu0 %v463
    %568 = vmatmul.f32.gmra.mxu0 %v547
    %v569 = vpop.f32.mrf.mxu0
    %v570 = vadd.f32 %v541, %v569
    %571 = vmatmul.f32.gmra.mxu0 %v550
    %v572 = vpop.f32.mrf.mxu0
    %v573 = vadd.f32 %v544, %v572
    %574 = vdwg.mxu0
    %575 = vrot.lane.b32.xlu0 %v87, 48
    %v576 = vpop.permute.xlu0 %575
    %v579 = vsel %vm95, %v405, 0
    %581 = vmatpush.msra.mxu0 0.0
    %582 = vmatpush.msra.mxu0 0.0
    %583 = vmatpush.msra.mxu0 0.0
    %584 = vmatpush.msra.mxu0 0.0
    %585 = vmatpush.msra.mxu0 0.0
    %586 = vmatpush.msra.mxu0 0.0
    %587 = vmatpush.msra.mxu0 0.0
    %588 = vmatpush.msra.mxu0 0.0
    %589 = vmatpush.msra.mxu0 0.0
    %590 = vmatpush.msra.mxu0 0.0
    %591 = vmatpush.msra.mxu0 0.0
    %592 = vmatpush.msra.mxu0 0.0
    %593 = vmatpush.msra.mxu0 0.0
    %594 = vmatpush.msra.mxu0 0.0
    %595 = vmatpush.msra.mxu0 0.0
    %596 = vmatpush.msra.mxu0 %v576
    %597 = vmatmul.f32.gmra.mxu0 %v579
    %v598 = vpop.f32.mrf.mxu0
    %v599 = vadd.f32 0.0, %v598
    %600 = vdwg.mxu0
    %601 = vrot.lane.b32.xlu0 %v90, 48
    %v602 = vpop.permute.xlu0 %601
    %v605 = vsel %vm95, %v409, 0
    %607 = vmatpush.msra.mxu0 0.0
    %608 = vmatpush.msra.mxu0 0.0
    %609 = vmatpush.msra.mxu0 0.0
    %610 = vmatpush.msra.mxu0 0.0
    %611 = vmatpush.msra.mxu0 0.0
    %612 = vmatpush.msra.mxu0 0.0
    %613 = vmatpush.msra.mxu0 0.0
    %614 = vmatpush.msra.mxu0 0.0
    %615 = vmatpush.msra.mxu0 0.0
    %616 = vmatpush.msra.mxu0 0.0
    %617 = vmatpush.msra.mxu0 0.0
    %618 = vmatpush.msra.mxu0 0.0
    %619 = vmatpush.msra.mxu0 0.0
    %620 = vmatpush.msra.mxu0 0.0
    %621 = vmatpush.msra.mxu0 0.0
    %622 = vmatpush.msra.mxu0 %v602
    %623 = vmatmul.f32.gmra.mxu0 %v605
    %v624 = vpop.f32.mrf.mxu0
    %v625 = vadd.f32 0.0, %v624
    %626 = vdwg.mxu0
    %v627 = vld [vmem:[%s2 + $0x10] sm:$0xff]
    %v629 = vsel %vm95, %v599, 0
    %v632 = vsel %vm95, %v625, 0
    %634 = vmatpush.msra.mxu0 0.0
    %635 = vmatpush.msra.mxu0 0.0
    %636 = vmatpush.msra.mxu0 0.0
    %637 = vmatpush.msra.mxu0 0.0
    %638 = vmatpush.msra.mxu0 0.0
    %639 = vmatpush.msra.mxu0 0.0
    %640 = vmatpush.msra.mxu0 0.0
    %641 = vmatpush.msra.mxu0 0.0
    %642 = vmatpush.msra.mxu0 0.0
    %643 = vmatpush.msra.mxu0 0.0
    %644 = vmatpush.msra.mxu0 0.0
    %645 = vmatpush.msra.mxu0 0.0
    %646 = vmatpush.msra.mxu0 0.0
    %647 = vmatpush.msra.mxu0 0.0
    %648 = vmatpush.msra.mxu0 0.0
    %649 = vmatpush.msra.mxu0 %v627
    %650 = vmatmul.f32.gmra.mxu0 %v629
    %v651 = vpop.f32.mrf.mxu0
    %v652 = vadd.f32 0.0, %v651
    %653 = vmatmul.f32.gmra.mxu0 %v632
    %v654 = vpop.f32.mrf.mxu0
    %v655 = vadd.f32 0.0, %v654
    %656 = vdwg.mxu0
    %v657 = vadd.f32 %v570, %v652
    %v658 = vadd.f32 %v573, %v655
    %659 = vrot.lane.b32.xlu0 %v87, 40
    %v660 = vpop.permute.xlu0 %659
    %v663 = vsel %vm95, %v406, 0
    %665 = vmatpush.msra.mxu0 0.0
    %666 = vmatpush.msra.mxu0 0.0
    %667 = vmatpush.msra.mxu0 0.0
    %668 = vmatpush.msra.mxu0 0.0
    %669 = vmatpush.msra.mxu0 0.0
    %670 = vmatpush.msra.mxu0 0.0
    %671 = vmatpush.msra.mxu0 0.0
    %672 = vmatpush.msra.mxu0 0.0
    %673 = vmatpush.msra.mxu0 0.0
    %674 = vmatpush.msra.mxu0 0.0
    %675 = vmatpush.msra.mxu0 0.0
    %676 = vmatpush.msra.mxu0 0.0
    %677 = vmatpush.msra.mxu0 0.0
    %678 = vmatpush.msra.mxu0 0.0
    %679 = vmatpush.msra.mxu0 0.0
    %680 = vmatpush.msra.mxu0 %v660
    %681 = vmatmul.f32.gmra.mxu0 %v663
    %v682 = vpop.f32.mrf.mxu0
    %v683 = vadd.f32 0.0, %v682
    %684 = vdwg.mxu0
    %685 = vrot.lane.b32.xlu0 %v90, 40
    %v686 = vpop.permute.xlu0 %685
    %v689 = vsel %vm95, %v410, 0
    %691 = vmatpush.msra.mxu0 0.0
    %692 = vmatpush.msra.mxu0 0.0
    %693 = vmatpush.msra.mxu0 0.0
    %694 = vmatpush.msra.mxu0 0.0
    %695 = vmatpush.msra.mxu0 0.0
    %696 = vmatpush.msra.mxu0 0.0
    %697 = vmatpush.msra.mxu0 0.0
    %698 = vmatpush.msra.mxu0 0.0
    %699 = vmatpush.msra.mxu0 0.0
    %700 = vmatpush.msra.mxu0 0.0
    %701 = vmatpush.msra.mxu0 0.0
    %702 = vmatpush.msra.mxu0 0.0
    %703 = vmatpush.msra.mxu0 0.0
    %704 = vmatpush.msra.mxu0 0.0
    %705 = vmatpush.msra.mxu0 0.0
    %706 = vmatpush.msra.mxu0 %v686
    %707 = vmatmul.f32.gmra.mxu0 %v689
    %v708 = vpop.f32.mrf.mxu0
    %v709 = vadd.f32 0.0, %v708
    %710 = vdwg.mxu0
    %v711 = vld [vmem:[%s2 + $0x18] sm:$0xff]
    %v713 = vsel %vm95, %v683, 0
    %v716 = vsel %vm95, %v709, 0
    %718 = vmatpush.msra.mxu0 0.0
    %719 = vmatpush.msra.mxu0 0.0
    %720 = vmatpush.msra.mxu0 0.0
    %721 = vmatpush.msra.mxu0 0.0
    %722 = vmatpush.msra.mxu0 0.0
    %723 = vmatpush.msra.mxu0 0.0
    %724 = vmatpush.msra.mxu0 0.0
    %725 = vmatpush.msra.mxu0 0.0
    %726 = vmatpush.msra.mxu0 0.0
    %727 = vmatpush.msra.mxu0 0.0
    %728 = vmatpush.msra.mxu0 0.0
    %729 = vmatpush.msra.mxu0 0.0
    %730 = vmatpush.msra.mxu0 0.0
    %731 = vmatpush.msra.mxu0 0.0
    %732 = vmatpush.msra.mxu0 0.0
    %733 = vmatpush.msra.mxu0 %v711
    %734 = vmatmul.f32.gmra.mxu0 %v713
    %v735 = vpop.f32.mrf.mxu0
    %v736 = vadd.f32 0.0, %v735
    %737 = vmatmul.f32.gmra.mxu0 %v716
    %v738 = vpop.f32.mrf.mxu0
    %v739 = vadd.f32 0.0, %v738
    %740 = vdwg.mxu0
    %v741 = vadd.f32 %v657, %v736
    %v742 = vadd.f32 %v658, %v739
    %v743 = vadd.f32 %v54, %v741
    %v744 = vadd.f32 %v55, %v742
    %v745 = vperm.slane %v56, 1
    %v746 = vadd.f32 %v743, %v745
    %v747 = vadd.f32 %v744, %v745
    %v748 = vsel %vm62, %v746, 0.0
    %749 = vadd.xlane.f32.xlu0 %v748
    %v750 = vpop.xlane.xlu0 %749
    %v751 = vsel %vm62, %v747, 0.0
    %752 = vadd.xlane.f32.xlu0 %v751
    %v753 = vpop.xlane.xlu0 %752
    %v754 = vrcp.pop 32.0
    %v755 = vmul.f32 32.0, %v754
    %v756 = vsub.f32 1.0, %v755
    %v757 = vmul.f32 %v754, %v756
    %v758 = vadd.f32 %v754, %v757
    %vm759 = vweird.f32 %v754
    %v760 = vsel %vm759, %v754, %v758
    %v761 = vmul.f32 %v750, %v760
    %v762 = vmul.f32 %v753, %v760
    %v763 = vsub.f32 %v746, %v761
    %v764 = vsub.f32 %v747, %v762
    %v765 = vmul.f32 %v763, %v763
    %v766 = vmul.f32 %v764, %v764
    %v767 = vsel %vm62, %v765, 0.0
    %768 = vadd.xlane.f32.xlu0 %v767
    %v769 = vpop.xlane.xlu0 %768
    %v770 = vsel %vm62, %v766, 0.0
    %771 = vadd.xlane.f32.xlu0 %v770
    %v772 = vpop.xlane.xlu0 %771
    %v773 = vmul.f32 %v769, %v760
    %v774 = vmul.f32 %v772, %v760
    %v775 = vadd.f32 %v773, 1e-05
    %v776 = vadd.f32 %v774, 1e-05
    %v777 = vrsqrt.pop %v775
    %v778 = vmul.f32 %v777, %v775
    %v779 = vmul.f32 %v778, %v777
    %v780 = vmul.f32 0.5, %v779
    %v781 = vsub.f32 1.5, %v780
    %v782 = vmul.f32 %v777, %v781
    %vm783 = vweird.f32 %v775
    %vm784 = vweird.f32 %v777
    %vm785 = vmor %vm783, %vm784
    %v786 = vsel %vm785, %v777, %v782
    %v787 = vrsqrt.pop %v776
    %v788 = vmul.f32 %v787, %v776
    %v789 = vmul.f32 %v788, %v787
    %v790 = vmul.f32 0.5, %v789
    %v791 = vsub.f32 1.5, %v790
    %v792 = vmul.f32 %v787, %v791
    %vm793 = vweird.f32 %v776
    %vm794 = vweird.f32 %v787
    %vm795 = vmor %vm793, %vm794
    %v796 = vsel %vm795, %v787, %v792
    %v797 = vmul.f32 %v763, %v786
    %v798 = vmul.f32 %v764, %v796
    %v799 = vperm.slane %v56, 4
    %v800 = vmul.f32 %v797, %v799
    %v801 = vmul.f32 %v798, %v799
    %v802 = vperm.slane %v56, 5
    %v803 = vadd.f32 %v800, %v802
    %v804 = vadd.f32 %v801, %v802
    %v805 = vld [vmem:[%s3] sm:$0xff]
    %v806 = vld [vmem:[%s3 + $0x8] sm:$0xff]
    %v807 = vld [vmem:[%s3 + $0x10] sm:$0xff]
    %v808 = vld [vmem:[%s3 + $0x18] sm:$0xff]
    %v809 = vperm.slane %v56, 2
    %v811 = vsel %vm62, %v803, 0
    %v814 = vsel %vm62, %v804, 0
    %816 = vmatpush.msra.mxu0 0.0
    %817 = vmatpush.msra.mxu0 0.0
    %818 = vmatpush.msra.mxu0 0.0
    %819 = vmatpush.msra.mxu0 0.0
    %820 = vmatpush.msra.mxu0 0.0
    %821 = vmatpush.msra.mxu0 0.0
    %822 = vmatpush.msra.mxu0 0.0
    %823 = vmatpush.msra.mxu0 0.0
    %824 = vmatpush.msra.mxu0 0.0
    %825 = vmatpush.msra.mxu0 0.0
    %826 = vmatpush.msra.mxu0 0.0
    %827 = vmatpush.msra.mxu0 0.0
    %828 = vmatpush.msra.mxu0 %v808
    %829 = vmatpush.msra.mxu0 %v807
    %830 = vmatpush.msra.mxu0 %v806
    %831 = vmatpush.msra.mxu0 %v805
    %832 = vmatmul.f32.gmra.mxu0 %v811
    %v833 = vpop.f32.mrf.mxu0
    %v834 = vadd.f32 %v809, %v833
    %835 = vmatmul.f32.gmra.mxu0 %v814
    %v836 = vpop.f32.mrf.mxu0
    %v837 = vadd.f32 %v809, %v836
    %838 = vdwg.mxu0
    %v839 = vmax.f32 %v834, 0.0
    %v840 = vmax.f32 %v837, 0.0
    %v841 = vld [vmem:[%s4] sm:$0xff]
    %v842 = vld [vmem:[%s4 + $0x8] sm:$0xff]
    %v843 = vld [vmem:[%s4 + $0x10] sm:$0xff]
    %v844 = vld [vmem:[%s4 + $0x18] sm:$0xff]
    %v845 = vld [vmem:[%s4 + $0x20] sm:$0xff]
    %v846 = vld [vmem:[%s4 + $0x28] sm:$0xff]
    %v847 = vld [vmem:[%s4 + $0x30] sm:$0xff]
    %v848 = vld [vmem:[%s4 + $0x38] sm:$0xff]
    %v849 = vperm.slane %v56, 3
    %vm850 = vcmask 523264
    %v852 = vsel %vm850, %v839, 0
    %v855 = vsel %vm850, %v840, 0
    %857 = vmatpush.msra.mxu0 0.0
    %858 = vmatpush.msra.mxu0 0.0
    %859 = vmatpush.msra.mxu0 0.0
    %860 = vmatpush.msra.mxu0 0.0
    %861 = vmatpush.msra.mxu0 0.0
    %862 = vmatpush.msra.mxu0 0.0
    %863 = vmatpush.msra.mxu0 0.0
    %864 = vmatpush.msra.mxu0 0.0
    %865 = vmatpush.msra.mxu0 %v848
    %866 = vmatpush.msra.mxu0 %v847
    %867 = vmatpush.msra.mxu0 %v846
    %868 = vmatpush.msra.mxu0 %v845
    %869 = vmatpush.msra.mxu0 %v844
    %870 = vmatpush.msra.mxu0 %v843
    %871 = vmatpush.msra.mxu0 %v842
    %872 = vmatpush.msra.mxu0 %v841
    %873 = vmatmul.f32.gmra.mxu0 %v852
    %v874 = vpop.f32.mrf.mxu0
    %v875 = vadd.f32 %v849, %v874
    %876 = vmatmul.f32.gmra.mxu0 %v855
    %v877 = vpop.f32.mrf.mxu0
    %v878 = vadd.f32 %v849, %v877
    %879 = vdwg.mxu0
    %v880 = vadd.f32 %v803, %v875
    %v881 = vadd.f32 %v804, %v878
    %v882 = vsel %vm62, %v880, 0.0
    %883 = vadd.xlane.f32.xlu0 %v882
    %v884 = vpop.xlane.xlu0 %883
    %v885 = vsel %vm62, %v881, 0.0
    %886 = vadd.xlane.f32.xlu0 %v885
    %v887 = vpop.xlane.xlu0 %886
    %v888 = vmul.f32 %v884, %v760
    %v889 = vmul.f32 %v887, %v760
    %v890 = vsub.f32 %v880, %v888
    %v891 = vsub.f32 %v881, %v889
    %v892 = vmul.f32 %v890, %v890
    %v893 = vmul.f32 %v891, %v891
    %v894 = vsel %vm62, %v892, 0.0
    %895 = vadd.xlane.f32.xlu0 %v894
    %v896 = vpop.xlane.xlu0 %895
    %v897 = vsel %vm62, %v893, 0.0
    %898 = vadd.xlane.f32.xlu0 %v897
    %v899 = vpop.xlane.xlu0 %898
    %v900 = vmul.f32 %v896, %v760
    %v901 = vmul.f32 %v899, %v760
    %v902 = vadd.f32 %v900, 1e-05
    %v903 = vadd.f32 %v901, 1e-05
    %v904 = vrsqrt.pop %v902
    %v905 = vmul.f32 %v904, %v902
    %v906 = vmul.f32 %v905, %v904
    %v907 = vmul.f32 0.5, %v906
    %v908 = vsub.f32 1.5, %v907
    %v909 = vmul.f32 %v904, %v908
    %vm910 = vweird.f32 %v902
    %vm911 = vweird.f32 %v904
    %vm912 = vmor %vm910, %vm911
    %v913 = vsel %vm912, %v904, %v909
    %v914 = vrsqrt.pop %v903
    %v915 = vmul.f32 %v914, %v903
    %v916 = vmul.f32 %v915, %v914
    %v917 = vmul.f32 0.5, %v916
    %v918 = vsub.f32 1.5, %v917
    %v919 = vmul.f32 %v914, %v918
    %vm920 = vweird.f32 %v903
    %vm921 = vweird.f32 %v914
    %vm922 = vmor %vm920, %vm921
    %v923 = vsel %vm922, %v914, %v919
    %v924 = vmul.f32 %v890, %v913
    %v925 = vmul.f32 %v891, %v923
    %v926 = vperm.slane %v56, 6
    %v927 = vmul.f32 %v924, %v926
    %v928 = vmul.f32 %v925, %v926
    %v929 = vperm.slane %v56, 7
    %v930 = vadd.f32 %v927, %v929
    %v931 = vadd.f32 %v928, %v929
    %932 = vst.msk [vmem:[#allocation7] sm:$0xff] %vm62, %v930
    %933 = vst.msk [vmem:[#allocation7 + $0x8] sm:$0xff] %vm62, %v931
    // Predicated region
    $region34: #{post_norm_logic.1} parent=1 // pred_check
      _
    $region35: #{post_norm_logic.1} parent=1 // pred_check_branch
      %935 = sbr.rel (0) target = $region37
    $region36: #{post_norm_logic.1} parent=1 // pred_region
      %937 = vsyncadd [#allocation4], 0
      %s938 = sshll.u32 [#allocation7], 4
      %s939 = int_to_ptr.vmem [resolvable:$true] %s938
      %s940 = sshll.u32 %s6, 4
      %s941 = int_to_ptr.hbm [resolvable:$true] %s940
      %946 = dma.vmem_to_hbm [thread:$0]  %s939, 256, %s941, [#allocation4], 128, 128, 8
    $region37: #{post_norm_logic.1} parent=1 // pred_fallthru
      _
    // Predicated region
    $region38: #{post_norm_logic.1} parent=1 // pred_check
      _
    $region39: #{post_norm_logic.1} parent=1 // pred_check_branch
      %948 = sbr.rel (0) target = $region41
    $region40: #{post_norm_logic.1} parent=1 // pred_region
      %950 = dma.done [#allocation4], 256
    $region41: #{post_norm_logic.1} parent=1 // pred_fallthru
      _
    %951 = vsyncpa [#allocation3], 1
    %952 = vsyncpa [#allocation6], 1
    %953 = vsyncpa [#allocation4], 1

</llo_original>
